<compile_context>
chip_gen: v5e
topology: v5e:2x2
jax: 0.10.0
libtpu: 0.0.40
codegen_flags: <defaults>
</compile_context>

<pallas_src>
import functools

import jax
import jax.numpy as jnp
from jax.experimental import pallas as pl
from jax.experimental.pallas import tpu as pltpu


# ---------------------------------------------------------------------------
# Path 1: whole table resident in VMEM, in-kernel row copies.
# ---------------------------------------------------------------------------
def _small_table_kernel(labels_ref, table_ref, out_ref):
    # labels_ref : (B_pad,) int32 in SMEM (scalar prefetch).
    # table_ref  : (V, D) full table in VMEM (same block every step -> fetched once).
    # out_ref    : (TB, D) output block in VMEM for this grid step.
    i = pl.program_id(0)
    tb = out_ref.shape[0]
    for r in range(tb):  # static unroll; TB is small
        idx = labels_ref[i * tb + r]              # scalar read from SMEM
        out_ref[pl.ds(r, 1), :] = table_ref[pl.ds(idx, 1), :]


def _embed_small_table(labels, table):
    (B,) = labels.shape
    V, D = table.shape

    # Rows gathered per grid step: multiple of 8 (sublane-dense output block),
    # capped so the unrolled copy loop stays short.
    TB = min(64, pl.cdiv(B, 8) * 8)
    B_pad = pl.cdiv(B, TB) * TB
    if B_pad != B:
        labels = jnp.concatenate([labels, jnp.zeros((B_pad - B,), jnp.int32)], axis=0)

    grid_spec = pltpu.PrefetchScalarGridSpec(
        num_scalar_prefetch=1,
        grid=(B_pad // TB,),
        in_specs=[pl.BlockSpec((V, D), lambda i, labels_ref: (0, 0))],
        out_specs=pl.BlockSpec((TB, D), lambda i, labels_ref: (i, 0)),
    )

    out = pl.pallas_call(
        _small_table_kernel,
        out_shape=jax.ShapeDtypeStruct((B_pad, D), table.dtype),
        grid_spec=grid_spec,
        compiler_params=pltpu.CompilerParams(
            dimension_semantics=("parallel",),  # megacore batch sharding on v7x
        ),
    )(labels, table)

    return out[:B] if B_pad != B else out


# ---------------------------------------------------------------------------
# Path 2: large table left in HBM, labels drive data-dependent row DMAs.
# ---------------------------------------------------------------------------
_TB = 8  # rows gathered per grid step (multiple of 8 -> sublane-dense output)


def _gather_rows_kernel(labels_ref, *refs):
    # labels_ref : (B_pad,) int32 in SMEM (consumed by the index_maps).
    # refs[:-1]  : _TB table-row blocks, each (1, D) in VMEM, already holding
    #              table[labels[i*_TB + r]] via the data-dependent index_map.
    # refs[-1]   : (_TB, D) output block in VMEM.
    del labels_ref
    out_ref = refs[-1]
    for r, row_ref in enumerate(refs[:-1]):
        out_ref[pl.ds(r, 1), :] = row_ref[...]


def _embed_row_gather(labels, table):
    (B,) = labels.shape
    V, D = table.shape

    B_pad = pl.cdiv(B, _TB) * _TB
    if B_pad != B:
        labels = jnp.concatenate([labels, jnp.zeros((B_pad - B,), jnp.int32)], axis=0)

    def row_index_map(i, labels_ref, *, r):
        # Block height is 1, so the block index along dim 0 is the row index.
        return (labels_ref[i * _TB + r], 0)

    in_specs = [
        pl.BlockSpec((1, D), functools.partial(row_index_map, r=r))
        for r in range(_TB)
    ]

    grid_spec = pltpu.PrefetchScalarGridSpec(
        num_scalar_prefetch=1,
        grid=(B_pad // _TB,),
        in_specs=in_specs,
        out_specs=pl.BlockSpec((_TB, D), lambda i, labels_ref: (i, 0)),
    )

    out = pl.pallas_call(
        _gather_rows_kernel,
        out_shape=jax.ShapeDtypeStruct((B_pad, D), table.dtype),
        grid_spec=grid_spec,
        compiler_params=pltpu.CompilerParams(
            dimension_semantics=("parallel",),
        ),
    )(labels, *([table] * _TB))

    return out[:B] if B_pad != B else out


# ---------------------------------------------------------------------------
# Public wrapper: matches LabelEmbedder.forward(labels) = Embedding(labels).
# ---------------------------------------------------------------------------
def label_embedder(labels, table, *, vmem_table_bytes_limit=4 * 1024 * 1024):
    """labels: integer array of any shape; table: (V, D).

    Returns table[labels] with shape labels.shape + (D,).
    """
    V, D = table.shape
    orig_shape = labels.shape
    flat = labels.reshape(-1).astype(jnp.int32)
    # TODO(synk): PyTorch raises on out-of-range labels; we clamp instead
    # (raising is not expressible inside a TPU kernel).
    flat = jnp.clip(flat, 0, V - 1)

    table_bytes = V * D * table.dtype.itemsize
    if table_bytes <= vmem_table_bytes_limit:
        out = _embed_small_table(flat, table)
    else:
        out = _embed_row_gather(flat, table)

    return out.reshape(orig_shape + (D,))


if __name__ == "__main__":
    num_labels = 16
    embedding_dim = 32
    batch = 8

    key = jax.random.PRNGKey(0)
    k_tab, k_lab = jax.random.split(key)

    # nn.Embedding default init: weight ~ N(0, 1)
    table = jax.random.normal(k_tab, (num_labels, embedding_dim), dtype=jnp.float32)
    labels = jax.random.randint(k_lab, (batch,), 0, num_labels, dtype=jnp.int32)

    ref = jnp.take(table, labels, axis=0)  # pure row copy -> exact match expected

    # Default path (small table -> VMEM-resident gather).
    out_small = jax.block_until_ready(label_embedder(labels, table))
    assert out_small.shape == (batch, embedding_dim)
    assert bool(jnp.array_equal(out_small, ref))

    # Force the large-table (data-dependent row-DMA) path for coverage.
    out_gather = jax.block_until_ready(
        label_embedder(labels, table, vmem_table_bytes_limit=0)
    )
    assert out_gather.shape == (batch, embedding_dim)
    assert bool(jnp.array_equal(out_gather, ref))

    print("KERNEL_OK")
</pallas_src>

<mosaic_0001>
module attributes {stable_mosaic.version = 11 : i64} {
  func.func @_small_table_kernel(%arg0: i32, %arg1: memref<8xi32, #tpu.memory_space<smem>>, %arg2: memref<16x32xf32, #tpu.memory_space<vmem>>, %arg3: memref<8x32xf32, #tpu.memory_space<vmem>>) attributes {dimension_semantics = [#tpu.dimension_semantics<parallel>], iteration_bounds = array<i64: 1>, scalar_prefetch = 1 : i64, scratch_operands = 0 : i64, tpu.core_type = #tpu.core_type<tc>, window_params = [{pipeline_mode = #tpu.pipeline_mode<synchronous>, transform_indices = @transform_0, window_bounds = array<i64: 16, 32>}, {transform_indices = @transform_1, window_bounds = array<i64: 8, 32>}]} {
    %c8_i32 = arith.constant 8 : i32
    %0 = arith.muli %arg0, %c8_i32 : i32
    %c0_i32 = arith.constant 0 : i32
    %1 = arith.addi %0, %c0_i32 : i32
    %2 = arith.index_cast %1 : i32 to index
    %3 = memref.load %arg1[%2] : memref<8xi32, #tpu.memory_space<smem>>
    %4 = arith.index_cast %3 : i32 to index
    %c0 = arith.constant 0 : index
    %5 = vector.load %arg2[%4, %c0] : memref<16x32xf32, #tpu.memory_space<vmem>>, vector<1x32xf32>
    %c0_0 = arith.constant 0 : index
    %c0_1 = arith.constant 0 : index
    %6 = vector.load %arg3[%c0_0, %c0_1] : memref<8x32xf32, #tpu.memory_space<vmem>>, vector<1x32xf32>
    tpu.vector_store %arg3[%c0_0, %c0_1], %5 {strides = array<i32>} : memref<8x32xf32, #tpu.memory_space<vmem>>, vector<1x32xf32>,
    %c8_i32_2 = arith.constant 8 : i32
    %7 = arith.muli %arg0, %c8_i32_2 : i32
    %c1_i32 = arith.constant 1 : i32
    %8 = arith.addi %7, %c1_i32 : i32
    %9 = arith.index_cast %8 : i32 to index
    %10 = memref.load %arg1[%9] : memref<8xi32, #tpu.memory_space<smem>>
    %11 = arith.index_cast %10 : i32 to index
    %c0_3 = arith.constant 0 : index
    %12 = vector.load %arg2[%11, %c0_3] : memref<16x32xf32, #tpu.memory_space<vmem>>, vector<1x32xf32>
    %c1 = arith.constant 1 : index
    %c0_4 = arith.constant 0 : index
    %13 = vector.load %arg3[%c1, %c0_4] : memref<8x32xf32, #tpu.memory_space<vmem>>, vector<1x32xf32>
    tpu.vector_store %arg3[%c1, %c0_4], %12 {strides = array<i32>} : memref<8x32xf32, #tpu.memory_space<vmem>>, vector<1x32xf32>,
    %c8_i32_5 = arith.constant 8 : i32
    %14 = arith.muli %arg0, %c8_i32_5 : i32
    %c2_i32 = arith.constant 2 : i32
    %15 = arith.addi %14, %c2_i32 : i32
    %16 = arith.index_cast %15 : i32 to index
    %17 = memref.load %arg1[%16] : memref<8xi32, #tpu.memory_space<smem>>
    %18 = arith.index_cast %17 : i32 to index
    %c0_6 = arith.constant 0 : index
    %19 = vector.load %arg2[%18, %c0_6] : memref<16x32xf32, #tpu.memory_space<vmem>>, vector<1x32xf32>
    %c2 = arith.constant 2 : index
    %c0_7 = arith.constant 0 : index
    %20 = vector.load %arg3[%c2, %c0_7] : memref<8x32xf32, #tpu.memory_space<vmem>>, vector<1x32xf32>
    tpu.vector_store %arg3[%c2, %c0_7], %19 {strides = array<i32>} : memref<8x32xf32, #tpu.memory_space<vmem>>, vector<1x32xf32>,
    %c8_i32_8 = arith.constant 8 : i32
    %21 = arith.muli %arg0, %c8_i32_8 : i32
    %c3_i32 = arith.constant 3 : i32
    %22 = arith.addi %21, %c3_i32 : i32
    %23 = arith.index_cast %22 : i32 to index
    %24 = memref.load %arg1[%23] : memref<8xi32, #tpu.memory_space<smem>>
    %25 = arith.index_cast %24 : i32 to index
    %c0_9 = arith.constant 0 : index
    %26 = vector.load %arg2[%25, %c0_9] : memref<16x32xf32, #tpu.memory_space<vmem>>, vector<1x32xf32>
    %c3 = arith.constant 3 : index
    %c0_10 = arith.constant 0 : index
    %27 = vector.load %arg3[%c3, %c0_10] : memref<8x32xf32, #tpu.memory_space<vmem>>, vector<1x32xf32>
    tpu.vector_store %arg3[%c3, %c0_10], %26 {strides = array<i32>} : memref<8x32xf32, #tpu.memory_space<vmem>>, vector<1x32xf32>,
    %c8_i32_11 = arith.constant 8 : i32
    %28 = arith.muli %arg0, %c8_i32_11 : i32
    %c4_i32 = arith.constant 4 : i32
    %29 = arith.addi %28, %c4_i32 : i32
    %30 = arith.index_cast %29 : i32 to index
    %31 = memref.load %arg1[%30] : memref<8xi32, #tpu.memory_space<smem>>
    %32 = arith.index_cast %31 : i32 to index
    %c0_12 = arith.constant 0 : index
    %33 = vector.load %arg2[%32, %c0_12] : memref<16x32xf32, #tpu.memory_space<vmem>>, vector<1x32xf32>
    %c4 = arith.constant 4 : index
    %c0_13 = arith.constant 0 : index
    %34 = vector.load %arg3[%c4, %c0_13] : memref<8x32xf32, #tpu.memory_space<vmem>>, vector<1x32xf32>
    tpu.vector_store %arg3[%c4, %c0_13], %33 {strides = array<i32>} : memref<8x32xf32, #tpu.memory_space<vmem>>, vector<1x32xf32>,
    %c8_i32_14 = arith.constant 8 : i32
    %35 = arith.muli %arg0, %c8_i32_14 : i32
    %c5_i32 = arith.constant 5 : i32
    %36 = arith.addi %35, %c5_i32 : i32
    %37 = arith.index_cast %36 : i32 to index
    %38 = memref.load %arg1[%37] : memref<8xi32, #tpu.memory_space<smem>>
    %39 = arith.index_cast %38 : i32 to index
    %c0_15 = arith.constant 0 : index
    %40 = vector.load %arg2[%39, %c0_15] : memref<16x32xf32, #tpu.memory_space<vmem>>, vector<1x32xf32>
    %c5 = arith.constant 5 : index
    %c0_16 = arith.constant 0 : index
    %41 = vector.load %arg3[%c5, %c0_16] : memref<8x32xf32, #tpu.memory_space<vmem>>, vector<1x32xf32>
    tpu.vector_store %arg3[%c5, %c0_16], %40 {strides = array<i32>} : memref<8x32xf32, #tpu.memory_space<vmem>>, vector<1x32xf32>,
    %c8_i32_17 = arith.constant 8 : i32
    %42 = arith.muli %arg0, %c8_i32_17 : i32
    %c6_i32 = arith.constant 6 : i32
    %43 = arith.addi %42, %c6_i32 : i32
    %44 = arith.index_cast %43 : i32 to index
    %45 = memref.load %arg1[%44] : memref<8xi32, #tpu.memory_space<smem>>
    %46 = arith.index_cast %45 : i32 to index
    %c0_18 = arith.constant 0 : index
    %47 = vector.load %arg2[%46, %c0_18] : memref<16x32xf32, #tpu.memory_space<vmem>>, vector<1x32xf32>
    %c6 = arith.constant 6 : index
    %c0_19 = arith.constant 0 : index
    %48 = vector.load %arg3[%c6, %c0_19] : memref<8x32xf32, #tpu.memory_space<vmem>>, vector<1x32xf32>
    tpu.vector_store %arg3[%c6, %c0_19], %47 {strides = array<i32>} : memref<8x32xf32, #tpu.memory_space<vmem>>, vector<1x32xf32>,
    %c8_i32_20 = arith.constant 8 : i32
    %49 = arith.muli %arg0, %c8_i32_20 : i32
    %c7_i32 = arith.constant 7 : i32
    %50 = arith.addi %49, %c7_i32 : i32
    %51 = arith.index_cast %50 : i32 to index
    %52 = memref.load %arg1[%51] : memref<8xi32, #tpu.memory_space<smem>>
    %53 = arith.index_cast %52 : i32 to index
    %c0_21 = arith.constant 0 : index
    %54 = vector.load %arg2[%53, %c0_21] : memref<16x32xf32, #tpu.memory_space<vmem>>, vector<1x32xf32>
    %c7 = arith.constant 7 : index
    %c0_22 = arith.constant 0 : index
    %55 = vector.load %arg3[%c7, %c0_22] : memref<8x32xf32, #tpu.memory_space<vmem>>, vector<1x32xf32>
    tpu.vector_store %arg3[%c7, %c0_22], %54 {strides = array<i32>} : memref<8x32xf32, #tpu.memory_space<vmem>>, vector<1x32xf32>,
    return
  }
  func.func @transform_0(%arg0: i32, %arg1: memref<8xi32, #tpu.memory_space<smem>>) -> (i32, i32) {
    %c0_i32 = arith.constant 0 : i32
    %c0_i32_0 = arith.constant 0 : i32
    %c0_i32_1 = arith.constant 0 : i32
    return %c0_i32, %c0_i32_0 : i32, i32
  }
  func.func @transform_1(%arg0: i32, %arg1: memref<8xi32, #tpu.memory_space<smem>>) -> (i32, i32) {
    %c0_i32 = arith.constant 0 : i32
    %c0_i32_0 = arith.constant 0 : i32
    return %arg0, %c0_i32 : i32, i32
  }
}

</mosaic_0001>

<llo_original>
// kernel: tpu_custom_call.1
$region0: #{tpu_custom_call.1}
  #allocation0 [shape = 'u32[]', space=smem, size = 0x4, offset = 0x4, fixed_abs, tag = 'smem constant byte address 0x4 - core index']
  #allocation1 [shape = 'u32[72,128]{1,0:T(1,128)}', space=vmem, size = 0x9000, scoped, tag = 'internal scratch']
  #allocation2 [shape = 's32[1]{0}', space=sflag, size = 0x4, scoped, tag = 'scoped memory for tpu_custom_call.1']
  #allocation3 [shape = 'u8[512]{0}', space=smem, size = 0x200, scoped, tag = 'prefetched SMEM operand 0']
  %s0 = inlined_call_operand.hbm [shape: s32[8], index: 0, kind: input, shape index: {}]
  %s1 = inlined_call_operand.hbm [shape: f32[16,32], index: 1, kind: input, shape index: {}]
  %s2 = inlined_call_operand.hbm [shape: f32[8,32], index: 2, kind: output, shape index: {}]
  %s3 = sld [smem:[#allocation0]]
  $region18: #{tpu_custom_call.1} parent=0
    _
  %s5 = ssub.s32 1, %s3
  %s6 = scalar_select 0, %s5, %s3
  %s8 = sshll.u32 %s0, 4
  %s9 = int_to_ptr.hbm [resolvable:$true] %s8
  %11 = dma.hbm_to_smem %s9, 16, [#allocation3], [#allocation2]
  %13 = dma.done [#allocation2], 16
  %14 = sfence
  $region1: #{tpu_custom_call.1} parent=0
    #allocation4 [shape = 'u8[8192]{0}', space=vmem, size = 0x2000, scoped, tag = 'input window, operand 1, single buffered']
    #allocation5 [shape = 's32[1]{0}', space=sflag, size = 0x4, scoped, tag = 'scoped memory for tpu_custom_call.1']
    #allocation6 [shape = 's32[1]{0}', space=sflag, size = 0x4, scoped, tag = 'scoped memory for tpu_custom_call.1']
    #allocation7 [shape = 'u8[4096]{0}', space=vmem, size = 0x1000, scoped, tag = 'output window, operand 0, single buffered']
    %15 = vsyncpa [#allocation5], 0
    %16 = vsyncpa [#allocation6], 0
    // Predicated region
    $region2: #{tpu_custom_call.1} parent=1 // pred_check
      _
    $region3: #{tpu_custom_call.1} parent=1 // pred_check_branch
      %18 = sbr.rel (0) target = $region5
    $region4: #{tpu_custom_call.1} parent=1 // pred_region
      %20 = vsyncadd [#allocation5], 0
      %s21 = sshll.u32 %s1, 4
      %s22 = int_to_ptr.hbm [resolvable:$true] %s21
      %s23 = sshll.u32 [#allocation4], 4
      %s24 = int_to_ptr.vmem [resolvable:$true] %s23
      %29 = dma.hbm_to_vmem [thread:$0]  %s22, 256, %s24, [#allocation5], 128, 128, 8
    $region5: #{tpu_custom_call.1} parent=1 // pred_fallthru
      _
    // Predicated region
    $region6: #{tpu_custom_call.1} parent=1 // pred_check
      _
    $region7: #{tpu_custom_call.1} parent=1 // pred_check_branch
      %31 = sbr.rel (0) target = $region9
    $region8: #{tpu_custom_call.1} parent=1 // pred_region
      %33 = dma.done [#allocation5], 256
    $region9: #{tpu_custom_call.1} parent=1 // pred_fallthru
      _
    %s34 = smul.u32 0, 8
    %s35 = sld [smem:[#allocation3 + %s34]]
    %s36 = scalar_lea.vmem [#allocation4], %s35
    %v37 = vld [vmem:[%s36] sm:$0x1]
    %vm38 = vcmask 253952
    %39 = vst.msk [vmem:[#allocation7] sm:$0x1] %vm38, %v37
    %s40 = sadd.s32 %s34, 1
    %s41 = sld [smem:[#allocation3 + %s40]]
    %s42 = scalar_lea.vmem [#allocation4], %s41
    %v43 = vld [vmem:[%s42] sm:$0x1]
    %44 = vst.msk [vmem:[#allocation7 + $0x1] sm:$0x1] %vm38, %v43
    %s45 = sadd.s32 %s34, 2
    %s46 = sld [smem:[#allocation3 + %s45]]
    %s47 = scalar_lea.vmem [#allocation4], %s46
    %v48 = vld [vmem:[%s47] sm:$0x1]
    %49 = vst.msk [vmem:[#allocation7 + $0x2] sm:$0x1] %vm38, %v48
    %s50 = sadd.s32 %s34, 3
    %s51 = sld [smem:[#allocation3 + %s50]]
    %s52 = scalar_lea.vmem [#allocation4], %s51
    %v53 = vld [vmem:[%s52] sm:$0x1]
    %54 = vst.msk [vmem:[#allocation7 + $0x3] sm:$0x1] %vm38, %v53
    %s55 = sadd.s32 %s34, 4
    %s56 = sld [smem:[#allocation3 + %s55]]
    %s57 = scalar_lea.vmem [#allocation4], %s56
    %v58 = vld [vmem:[%s57] sm:$0x1]
    %59 = vst.msk [vmem:[#allocation7 + $0x4] sm:$0x1] %vm38, %v58
    %s60 = sadd.s32 %s34, 5
    %s61 = sld [smem:[#allocation3 + %s60]]
    %s62 = scalar_lea.vmem [#allocation4], %s61
    %v63 = vld [vmem:[%s62] sm:$0x1]
    %64 = vst.msk [vmem:[#allocation7 + $0x5] sm:$0x1] %vm38, %v63
    %s65 = sadd.s32 %s34, 6
    %s66 = sld [smem:[#allocation3 + %s65]]
    %s67 = scalar_lea.vmem [#allocation4], %s66
    %v68 = vld [vmem:[%s67] sm:$0x1]
    %69 = vst.msk [vmem:[#allocation7 + $0x6] sm:$0x1] %vm38, %v68
    %s70 = sadd.s32 %s34, 7
    %s71 = sld [smem:[#allocation3 + %s70]]
    %s72 = scalar_lea.vmem [#allocation4], %s71
    %v73 = vld [vmem:[%s72] sm:$0x1]
    %74 = vst.msk [vmem:[#allocation7 + $0x7] sm:$0x1] %vm38, %v73
    // Predicated region
    $region10: #{tpu_custom_call.1} parent=1 // pred_check
      _
    $region11: #{tpu_custom_call.1} parent=1 // pred_check_branch
      %76 = sbr.rel (0) target = $region13
    $region12: #{tpu_custom_call.1} parent=1 // pred_region
      %78 = vsyncadd [#allocation6], 0
      %s80 = sshll.u32 [#allocation7], 4
      %s81 = int_to_ptr.vmem [resolvable:$true] %s80
      %s82 = sshll.u32 %s2, 4
      %s83 = int_to_ptr.hbm [resolvable:$true] %s82
      %85 = dma.vmem_to_hbm [thread:$0]  %s81, 128, %s83, [#allocation6]
    $region13: #{tpu_custom_call.1} parent=1 // pred_fallthru
      _
    // Predicated region
    $region14: #{tpu_custom_call.1} parent=1 // pred_check
      _
    $region15: #{tpu_custom_call.1} parent=1 // pred_check_branch
      %87 = sbr.rel (0) target = $region17
    $region16: #{tpu_custom_call.1} parent=1 // pred_region
      %89 = dma.done [#allocation6], 128
    $region17: #{tpu_custom_call.1} parent=1 // pred_fallthru
      _
    %90 = vsyncpa [#allocation5], 1
    %91 = vsyncpa [#allocation6], 1

</llo_original>
